<compile_context>
chip_gen: v5e
topology: v5e:2x2
jax: 0.10.0
libtpu: 0.0.40
codegen_flags: <defaults>
</compile_context>

<pallas_src>
import numpy as np
import jax
import jax.numpy as jnp
from jax.experimental import pallas as pl
from jax.experimental.pallas import tpu as pltpu

LANE = 128
SUBLANE = 8


def _round_up(x, m):
    return ((x + m - 1) // m) * m


def actor_kernel(x_ref,
                 w1_ref, b1_ref,
                 w2_ref, b2_ref,
                 w3_ref, b3_ref,
                 w4t_ref, b4t_ref,
                 out_ref):
    """Fused 4-layer MLP forward for one batch tile.

    Layers 1-3 run in the standard (batch, features) orientation; the final
    layer is computed transposed so the stored output tile is
    (round_up(action_dim, 8), tile_b) with the batch on the lane axis.
    Weights are bf16 (MXU operands); accumulation and elementwise math are f32.
    """
    wdt = w1_ref.dtype

    x = x_ref[...].astype(wdt)

    # fc1 + relu
    h = jnp.dot(x, w1_ref[...], preferred_element_type=jnp.float32)
    h = jnp.maximum(h + b1_ref[...], 0.0)

    # fc2 + relu
    h = jnp.dot(h.astype(wdt), w2_ref[...], preferred_element_type=jnp.float32)
    h = jnp.maximum(h + b2_ref[...], 0.0)

    # fc3 + relu
    h = jnp.dot(h.astype(wdt), w3_ref[...], preferred_element_type=jnp.float32)
    h = jnp.maximum(h + b3_ref[...], 0.0)

    # fc4 (transposed): a_t[a, b] = sum_k W4[a, k] * h[b, k]   -> (a_sub, tile_b)
    a_t = jax.lax.dot_general(
        w4t_ref[...], h.astype(wdt),
        dimension_numbers=(((1,), (1,)), ((), ())),
        preferred_element_type=jnp.float32)
    a_t = jnp.maximum(a_t + b4t_ref[...], 0.0)    # relu, per spec
    out_ref[...] = jnp.tanh(a_t).astype(out_ref.dtype)


def _choose_tile(n, requested):
    """Pick the batch tile.

    Small batches: one full-extent tile (block == array dims, so no (8,128)
    divisibility constraint and no padding).  Large batches: a lane-dense
    multiple of 256, capped near n/2 so there are always >= 2 grid steps
    (v7x megacore) while still amortizing the ~0.35 us per-step overhead.
    """
    if n <= 256:
        return n
    t = min(int(requested), _round_up(n, 256) // 2)
    t = max(256, (t // 256) * 256)
    return t


def actor_forward(state, params, action_dim, *, tile_b=2048):
    """state: [n, state_dim] float; params: padded dict from init_actor_params.

    Returns [n, action_dim] f32 actions.
    """
    n, k = state.shape
    a_sub = params["w4t"].shape[0]          # action_dim rounded up to 8 sublanes

    tile = _choose_tile(n, tile_b)
    grid = (pl.cdiv(n, tile),)              # ragged tail masked by Pallas

    # Weights/biases: constant index_map -> loaded once, VMEM-resident.
    def const_spec(arr):
        return pl.BlockSpec(arr.shape, lambda i, _nd=arr.ndim: (0,) * _nd)

    weight_args = (params["w1"], params["b1"],
                   params["w2"], params["b2"],
                   params["w3"], params["b3"],
                   params["w4t"], params["b4t"])

    out_t = pl.pallas_call(
        actor_kernel,
        out_shape=jax.ShapeDtypeStruct((a_sub, n), jnp.float32),
        grid=grid,
        in_specs=[pl.BlockSpec((tile, k), lambda i: (i, 0))]
                 + [const_spec(a) for a in weight_args],
        out_specs=pl.BlockSpec((a_sub, tile), lambda i: (0, i)),
        compiler_params=pltpu.CompilerParams(
            dimension_semantics=("parallel",),
            vmem_limit_bytes=32 * 1024 * 1024),
    )(state, *weight_args)

    # Tiny (a_sub, n) slab -> [n, action_dim]; ~16x less data than the old
    # 128-lane-padded slice.
    return out_t[:action_dim, :].T


def init_actor_params(key, state_dim, action_dim, neurons,
                      weight_dtype=jnp.bfloat16):
    """Init mirroring the PyTorch module, zero-padded to TPU-friendly widths.

    fanin_init uses weight.size()[0] == out_features -> v = 1/sqrt(out_features)
    for fc1..fc3; fc4 weight is +/-0.003.  Biases keep PyTorch's default Linear
    range 1/sqrt(in_features).  Zero padding keeps the math exactly equal to
    the unpadded MLP.  Weights are cast to bf16 (MXU operands) -- expect
    ~1e-2-level deviation vs a true f32 PyTorch module; pass
    weight_dtype=jnp.float32 for exact-precision inference.
    """
    h_pad = _round_up(neurons, LANE)
    a_sub = _round_up(action_dim, SUBLANE)

    keys = jax.random.split(key, 8)

    def hidden_linear(kw, kb, fan_in, fan_out, pad_in, pad_out, w_range):
        w = jax.random.uniform(kw, (fan_in, fan_out), jnp.float32,
                               minval=-w_range, maxval=w_range)
        b_range = 1.0 / np.sqrt(fan_in)
        b = jax.random.uniform(kb, (1, fan_out), jnp.float32,
                               minval=-b_range, maxval=b_range)
        w_p = jnp.zeros((pad_in, pad_out), jnp.float32).at[:fan_in, :fan_out].set(w)
        b_p = jnp.zeros((1, pad_out), jnp.float32).at[:, :fan_out].set(b)
        return w_p.astype(weight_dtype), b_p

    w1, b1 = hidden_linear(keys[0], keys[1], state_dim, neurons,
                           state_dim, h_pad, 1.0 / np.sqrt(neurons))
    w2, b2 = hidden_linear(keys[2], keys[3], neurons, neurons,
                           h_pad, h_pad, 1.0 / np.sqrt(neurons))
    w3, b3 = hidden_linear(keys[4], keys[5], neurons, neurons,
                           h_pad, h_pad, 1.0 / np.sqrt(neurons))

    # fc4 stored in PyTorch-native [out, in] orientation (transposed for the
    # kernel's last-layer A @ B^T), padded to (a_sub, h_pad); bias as a column.
    w4 = jax.random.uniform(keys[6], (action_dim, neurons), jnp.float32,
                            minval=-0.003, maxval=0.003)
    b4_range = 1.0 / np.sqrt(neurons)
    b4 = jax.random.uniform(keys[7], (action_dim, 1), jnp.float32,
                            minval=-b4_range, maxval=b4_range)
    w4t = (jnp.zeros((a_sub, h_pad), jnp.float32)
           .at[:action_dim, :neurons].set(w4).astype(weight_dtype))
    b4t = jnp.zeros((a_sub, 1), jnp.float32).at[:action_dim, :].set(b4)

    return dict(w1=w1, b1=b1, w2=w2, b2=b2, w3=w3, b3=b3, w4t=w4t, b4t=b4t)


def actor_reference(state, p, action_dim):
    """Pure-JAX reference sharing the same dtype path (bf16 MXU, f32 accum)."""
    wdt = p["w1"].dtype
    h = jnp.maximum(jnp.dot(state.astype(wdt), p["w1"],
                            preferred_element_type=jnp.float32) + p["b1"], 0.0)
    h = jnp.maximum(jnp.dot(h.astype(wdt), p["w2"],
                            preferred_element_type=jnp.float32) + p["b2"], 0.0)
    h = jnp.maximum(jnp.dot(h.astype(wdt), p["w3"],
                            preferred_element_type=jnp.float32) + p["b3"], 0.0)
    a = jnp.maximum(jnp.dot(h.astype(wdt), p["w4t"].T,
                            preferred_element_type=jnp.float32) + p["b4t"].T, 0.0)
    return jnp.tanh(a)[:, :action_dim]


if __name__ == "__main__":
    state_dim, action_dim, neurons = 16, 8, 32

    key = jax.random.PRNGKey(0)
    k_params, k_s1, k_s2 = jax.random.split(key, 3)

    params = init_actor_params(k_params, state_dim, action_dim, neurons)

    # Small batch: single full-extent tile, 1 grid step.
    state_small = jax.random.normal(k_s1, (24, state_dim), jnp.float32)
    out_small = jax.block_until_ready(actor_forward(state_small, params, action_dim))
    ref_small = actor_reference(state_small, params, action_dim)
    np.testing.assert_allclose(np.asarray(out_small), np.asarray(ref_small),
                               rtol=1e-3, atol=1e-3)
    assert out_small.shape == (24, action_dim)

    # Larger batch: multi-step parallel grid (3 steps of 256) with a ragged,
    # Pallas-masked final tile — exercises the optimized large-batch path.
    state_big = jax.random.normal(k_s2, (600, state_dim), jnp.float32)
    out_big = jax.block_until_ready(actor_forward(state_big, params, action_dim))
    ref_big = actor_reference(state_big, params, action_dim)
    np.testing.assert_allclose(np.asarray(out_big), np.asarray(ref_big),
                               rtol=1e-3, atol=1e-3)
    assert out_big.shape == (600, action_dim)

    print("KERNEL_OK")
</pallas_src>

<mosaic_0001>
module attributes {stable_mosaic.version = 11 : i64} {
  func.func @actor_kernel(%arg0: i32, %arg1: memref<24x16xf32, #tpu.memory_space<vmem>>, %arg2: memref<16x128xbf16, #tpu.memory_space<vmem>>, %arg3: memref<1x128xf32, #tpu.memory_space<vmem>>, %arg4: memref<128x128xbf16, #tpu.memory_space<vmem>>, %arg5: memref<1x128xf32, #tpu.memory_space<vmem>>, %arg6: memref<128x128xbf16, #tpu.memory_space<vmem>>, %arg7: memref<1x128xf32, #tpu.memory_space<vmem>>, %arg8: memref<8x128xbf16, #tpu.memory_space<vmem>>, %arg9: memref<8x1xf32, #tpu.memory_space<vmem>>, %arg10: memref<8x24xf32, #tpu.memory_space<vmem>>) attributes {dimension_semantics = [#tpu.dimension_semantics<parallel>], iteration_bounds = array<i64: 1>, scalar_prefetch = 0 : i64, scratch_operands = 0 : i64, tpu.core_type = #tpu.core_type<tc>, window_params = [{transform_indices = @transform_0, window_bounds = array<i64: 24, 16>}, {pipeline_mode = #tpu.pipeline_mode<synchronous>, transform_indices = @transform_1, window_bounds = array<i64: 16, 128>}, {pipeline_mode = #tpu.pipeline_mode<synchronous>, transform_indices = @transform_2, window_bounds = array<i64: 1, 128>}, {pipeline_mode = #tpu.pipeline_mode<synchronous>, transform_indices = @transform_3, window_bounds = array<i64: 128, 128>}, {pipeline_mode = #tpu.pipeline_mode<synchronous>, transform_indices = @transform_4, window_bounds = array<i64: 1, 128>}, {pipeline_mode = #tpu.pipeline_mode<synchronous>, transform_indices = @transform_5, window_bounds = array<i64: 128, 128>}, {pipeline_mode = #tpu.pipeline_mode<synchronous>, transform_indices = @transform_6, window_bounds = array<i64: 1, 128>}, {pipeline_mode = #tpu.pipeline_mode<synchronous>, transform_indices = @transform_7, window_bounds = array<i64: 8, 128>}, {pipeline_mode = #tpu.pipeline_mode<synchronous>, transform_indices = @transform_8, window_bounds = array<i64: 8, 1>}, {transform_indices = @transform_9, window_bounds = array<i64: 8, 24>}]} {
    %c0 = arith.constant 0 : index
    %c0_0 = arith.constant 0 : index
    %0 = vector.load %arg1[%c0, %c0_0] : memref<24x16xf32, #tpu.memory_space<vmem>>, vector<24x16xf32>
    %1 = arith.truncf %0 : vector<24x16xf32> to vector<24x16xbf16>
    %c0_1 = arith.constant 0 : index
    %c0_2 = arith.constant 0 : index
    %2 = vector.load %arg2[%c0_1, %c0_2] : memref<16x128xbf16, #tpu.memory_space<vmem>>, vector<16x128xbf16>
    %cst = arith.constant dense<0.000000e+00> : vector<24x128xf32>
    %3 = tpu.matmul %1, %2, %cst {dimension_numbers = #tpu.dot_dimension_numbers<[1], [0], [0], [1], [0, 0, 1, 1], [], []>} : vector<24x16xbf16>, vector<16x128xbf16>, vector<24x128xf32> -> vector<24x128xf32>
    %c0_3 = arith.constant 0 : index
    %c0_4 = arith.constant 0 : index
    %4 = vector.load %arg3[%c0_3, %c0_4] : memref<1x128xf32, #tpu.memory_space<vmem>>, vector<1x128xf32>
    %5 = vector.broadcast %4 : vector<1x128xf32> to vector<24x128xf32>
    %6 = arith.addf %3, %5 : vector<24x128xf32>
    %cst_5 = arith.constant 0.000000e+00 : f32
    %7 = vector.broadcast %cst_5 : f32 to vector<24x128xf32>
    %8 = arith.maximumf %6, %7 : vector<24x128xf32>
    %9 = arith.truncf %8 : vector<24x128xf32> to vector<24x128xbf16>
    %c0_6 = arith.constant 0 : index
    %c0_7 = arith.constant 0 : index
    %10 = vector.load %arg4[%c0_6, %c0_7] : memref<128x128xbf16, #tpu.memory_space<vmem>>, vector<128x128xbf16>
    %cst_8 = arith.constant dense<0.000000e+00> : vector<24x128xf32>
    %11 = tpu.matmul %9, %10, %cst_8 {dimension_numbers = #tpu.dot_dimension_numbers<[1], [0], [0], [1], [0, 0, 1, 1], [], []>} : vector<24x128xbf16>, vector<128x128xbf16>, vector<24x128xf32> -> vector<24x128xf32>
    %c0_9 = arith.constant 0 : index
    %c0_10 = arith.constant 0 : index
    %12 = vector.load %arg5[%c0_9, %c0_10] : memref<1x128xf32, #tpu.memory_space<vmem>>, vector<1x128xf32>
    %13 = vector.broadcast %12 : vector<1x128xf32> to vector<24x128xf32>
    %14 = arith.addf %11, %13 : vector<24x128xf32>
    %cst_11 = arith.constant 0.000000e+00 : f32
    %15 = vector.broadcast %cst_11 : f32 to vector<24x128xf32>
    %16 = arith.maximumf %14, %15 : vector<24x128xf32>
    %17 = arith.truncf %16 : vector<24x128xf32> to vector<24x128xbf16>
    %c0_12 = arith.constant 0 : index
    %c0_13 = arith.constant 0 : index
    %18 = vector.load %arg6[%c0_12, %c0_13] : memref<128x128xbf16, #tpu.memory_space<vmem>>, vector<128x128xbf16>
    %cst_14 = arith.constant dense<0.000000e+00> : vector<24x128xf32>
    %19 = tpu.matmul %17, %18, %cst_14 {dimension_numbers = #tpu.dot_dimension_numbers<[1], [0], [0], [1], [0, 0, 1, 1], [], []>} : vector<24x128xbf16>, vector<128x128xbf16>, vector<24x128xf32> -> vector<24x128xf32>
    %c0_15 = arith.constant 0 : index
    %c0_16 = arith.constant 0 : index
    %20 = vector.load %arg7[%c0_15, %c0_16] : memref<1x128xf32, #tpu.memory_space<vmem>>, vector<1x128xf32>
    %21 = vector.broadcast %20 : vector<1x128xf32> to vector<24x128xf32>
    %22 = arith.addf %19, %21 : vector<24x128xf32>
    %cst_17 = arith.constant 0.000000e+00 : f32
    %23 = vector.broadcast %cst_17 : f32 to vector<24x128xf32>
    %24 = arith.maximumf %22, %23 : vector<24x128xf32>
    %c0_18 = arith.constant 0 : index
    %c0_19 = arith.constant 0 : index
    %25 = vector.load %arg8[%c0_18, %c0_19] : memref<8x128xbf16, #tpu.memory_space<vmem>>, vector<8x128xbf16>
    %26 = arith.truncf %24 : vector<24x128xf32> to vector<24x128xbf16>
    %cst_20 = arith.constant dense<0.000000e+00> : vector<8x24xf32>
    %27 = tpu.matmul %25, %26, %cst_20 {dimension_numbers = #tpu.dot_dimension_numbers<[1], [1], [0], [0], [0, 0, 1, 0], [], []>} : vector<8x128xbf16>, vector<24x128xbf16>, vector<8x24xf32> -> vector<8x24xf32>
    %c0_21 = arith.constant 0 : index
    %c0_22 = arith.constant 0 : index
    %28 = vector.load %arg9[%c0_21, %c0_22] : memref<8x1xf32, #tpu.memory_space<vmem>>, vector<8x1xf32>
    %29 = vector.broadcast %28 : vector<8x1xf32> to vector<8x24xf32>
    %30 = arith.addf %27, %29 : vector<8x24xf32>
    %cst_23 = arith.constant 0.000000e+00 : f32
    %31 = vector.broadcast %cst_23 : f32 to vector<8x24xf32>
    %32 = arith.maximumf %30, %31 : vector<8x24xf32>
    %33 = math.tanh %32 : vector<8x24xf32>
    %c0_24 = arith.constant 0 : index
    %c0_25 = arith.constant 0 : index
    %34 = vector.load %arg10[%c0_24, %c0_25] : memref<8x24xf32, #tpu.memory_space<vmem>>, vector<8x24xf32>
    tpu.vector_store %arg10[%c0_24, %c0_25], %33 {strides = array<i32>} : memref<8x24xf32, #tpu.memory_space<vmem>>, vector<8x24xf32>,
    return
  }
  func.func @transform_0(%arg0: i32) -> (i32, i32) {
    %c0_i32 = arith.constant 0 : i32
    %c0_i32_0 = arith.constant 0 : i32
    return %arg0, %c0_i32 : i32, i32
  }
  func.func @transform_1(%arg0: i32) -> (i32, i32) {
    %c0_i32 = arith.constant 0 : i32
    %c0_i32_0 = arith.constant 0 : i32
    %c0_i32_1 = arith.constant 0 : i32
    return %c0_i32, %c0_i32_0 : i32, i32
  }
  func.func @transform_2(%arg0: i32) -> (i32, i32) {
    %c0_i32 = arith.constant 0 : i32
    %c0_i32_0 = arith.constant 0 : i32
    %c0_i32_1 = arith.constant 0 : i32
    return %c0_i32, %c0_i32_0 : i32, i32
  }
  func.func @transform_3(%arg0: i32) -> (i32, i32) {
    %c0_i32 = arith.constant 0 : i32
    %c0_i32_0 = arith.constant 0 : i32
    %c0_i32_1 = arith.constant 0 : i32
    return %c0_i32, %c0_i32_0 : i32, i32
  }
  func.func @transform_4(%arg0: i32) -> (i32, i32) {
    %c0_i32 = arith.constant 0 : i32
    %c0_i32_0 = arith.constant 0 : i32
    %c0_i32_1 = arith.constant 0 : i32
    return %c0_i32, %c0_i32_0 : i32, i32
  }
  func.func @transform_5(%arg0: i32) -> (i32, i32) {
    %c0_i32 = arith.constant 0 : i32
    %c0_i32_0 = arith.constant 0 : i32
    %c0_i32_1 = arith.constant 0 : i32
    return %c0_i32, %c0_i32_0 : i32, i32
  }
  func.func @transform_6(%arg0: i32) -> (i32, i32) {
    %c0_i32 = arith.constant 0 : i32
    %c0_i32_0 = arith.constant 0 : i32
    %c0_i32_1 = arith.constant 0 : i32
    return %c0_i32, %c0_i32_0 : i32, i32
  }
  func.func @transform_7(%arg0: i32) -> (i32, i32) {
    %c0_i32 = arith.constant 0 : i32
    %c0_i32_0 = arith.constant 0 : i32
    %c0_i32_1 = arith.constant 0 : i32
    return %c0_i32, %c0_i32_0 : i32, i32
  }
  func.func @transform_8(%arg0: i32) -> (i32, i32) {
    %c0_i32 = arith.constant 0 : i32
    %c0_i32_0 = arith.constant 0 : i32
    %c0_i32_1 = arith.constant 0 : i32
    return %c0_i32, %c0_i32_0 : i32, i32
  }
  func.func @transform_9(%arg0: i32) -> (i32, i32) {
    %c0_i32 = arith.constant 0 : i32
    %c0_i32_0 = arith.constant 0 : i32
    return %c0_i32, %arg0 : i32, i32
  }
}

</mosaic_0001>

<llo_original>
// kernel: tpu_custom_call.1
$region0: #{tpu_custom_call.1}
  #allocation0 [shape = 'u32[]', space=smem, size = 0x4, offset = 0x4, fixed_abs, tag = 'smem constant byte address 0x4 - core index']
  #allocation1 [shape = 'u32[72,128]{1,0:T(1,128)}', space=vmem, size = 0x9000, scoped, tag = 'internal scratch']
  %s0 = inlined_call_operand.vmem [shape: f32[24,16], index: 0, kind: input, shape index: {}]
  %s1 = inlined_call_operand.vmem [shape: bf16[16,128], index: 1, kind: input, shape index: {}]
  %s2 = inlined_call_operand.vmem [shape: f32[1,128], index: 2, kind: input, shape index: {}]
  %s3 = inlined_call_operand.hbm [shape: bf16[128,128], index: 3, kind: input, shape index: {}]
  %s4 = inlined_call_operand.vmem [shape: f32[1,128], index: 4, kind: input, shape index: {}]
  %s5 = inlined_call_operand.hbm [shape: bf16[128,128], index: 5, kind: input, shape index: {}]
  %s6 = inlined_call_operand.vmem [shape: f32[1,128], index: 6, kind: input, shape index: {}]
  %s7 = inlined_call_operand.vmem [shape: bf16[8,128], index: 7, kind: input, shape index: {}]
  %s8 = inlined_call_operand.vmem [shape: f32[8,1], index: 8, kind: input, shape index: {}]
  %s9 = inlined_call_operand.hbm [shape: f32[8,24], index: 9, kind: output, shape index: {}]
  %s10 = sld [smem:[#allocation0]]
  $region54: #{tpu_custom_call.1} parent=0
    _
  %s12 = ssub.s32 1, %s10
  %s13 = scalar_select 0, %s12, %s10
  $region1: #{tpu_custom_call.1} parent=0
    #allocation2 [shape = 'u8[32768]{0}', space=vmem, size = 0x8000, scoped, tag = 'input window, operand 3, single buffered']
    #allocation3 [shape = 's32[1]{0}', space=sflag, size = 0x4, scoped, tag = 'scoped memory for tpu_custom_call.1']
    #allocation4 [shape = 's32[1]{0}', space=sflag, size = 0x4, scoped, tag = 'scoped memory for tpu_custom_call.1']
    #allocation5 [shape = 'u8[32768]{0}', space=vmem, size = 0x8000, scoped, tag = 'input window, operand 5, single buffered']
    #allocation6 [shape = 's32[1]{0}', space=sflag, size = 0x4, scoped, tag = 'scoped memory for tpu_custom_call.1']
    #allocation7 [shape = 'u8[4096]{0}', space=vmem, size = 0x1000, scoped, tag = 'output window, operand 0, single buffered']
    %14 = vsyncpa [#allocation3], 0
    %15 = vsyncpa [#allocation6], 0
    %16 = vsyncpa [#allocation4], 0
    // Predicated region
    $region2: #{tpu_custom_call.1} parent=1 // pred_check
      _
    $region3: #{tpu_custom_call.1} parent=1 // pred_check_branch
      %18 = sbr.rel (0) target = $region5
    $region4: #{tpu_custom_call.1} parent=1 // pred_region
      _
    $region5: #{tpu_custom_call.1} parent=1 // pred_fallthru
      _
    // Predicated region
    $region6: #{tpu_custom_call.1} parent=1 // pred_check
      _
    $region7: #{tpu_custom_call.1} parent=1 // pred_check_branch
      %20 = sbr.rel (0) target = $region9
    $region8: #{tpu_custom_call.1} parent=1 // pred_region
      _
    $region9: #{tpu_custom_call.1} parent=1 // pred_fallthru
      _
    // Predicated region
    $region10: #{tpu_custom_call.1} parent=1 // pred_check
      _
    $region11: #{tpu_custom_call.1} parent=1 // pred_check_branch
      %22 = sbr.rel (0) target = $region13
    $region12: #{tpu_custom_call.1} parent=1 // pred_region
      _
    $region13: #{tpu_custom_call.1} parent=1 // pred_fallthru
      _
    // Predicated region
    $region14: #{tpu_custom_call.1} parent=1 // pred_check
      _
    $region15: #{tpu_custom_call.1} parent=1 // pred_check_branch
      %24 = sbr.rel (0) target = $region17
    $region16: #{tpu_custom_call.1} parent=1 // pred_region
      %26 = vsyncadd [#allocation3], 0
      %s27 = sshll.u32 %s3, 4
      %s28 = int_to_ptr.hbm [resolvable:$true] %s27
      %s29 = sshll.u32 [#allocation2], 4
      %s30 = int_to_ptr.vmem [resolvable:$true] %s29
      %35 = dma.hbm_to_vmem [thread:$0]  %s28, 1024, %s30, [#allocation3], 64, 64, 4
    $region17: #{tpu_custom_call.1} parent=1 // pred_fallthru
      _
    // Predicated region
    $region18: #{tpu_custom_call.1} parent=1 // pred_check
      _
    $region19: #{tpu_custom_call.1} parent=1 // pred_check_branch
      %37 = sbr.rel (0) target = $region21
    $region20: #{tpu_custom_call.1} parent=1 // pred_region
      _
    $region21: #{tpu_custom_call.1} parent=1 // pred_fallthru
      _
    // Predicated region
    $region22: #{tpu_custom_call.1} parent=1 // pred_check
      _
    $region23: #{tpu_custom_call.1} parent=1 // pred_check_branch
      %39 = sbr.rel (0) target = $region25
    $region24: #{tpu_custom_call.1} parent=1 // pred_region
      %41 = vsyncadd [#allocation6], 0
      %s42 = sshll.u32 %s5, 4
      %s43 = int_to_ptr.hbm [resolvable:$true] %s42
      %s44 = sshll.u32 [#allocation5], 4
      %s45 = int_to_ptr.vmem [resolvable:$true] %s44
      %50 = dma.hbm_to_vmem [thread:$0]  %s43, 1024, %s45, [#allocation6], 64, 64, 4
    $region25: #{tpu_custom_call.1} parent=1 // pred_fallthru
      _
    // Predicated region
    $region26: #{tpu_custom_call.1} parent=1 // pred_check
      _
    $region27: #{tpu_custom_call.1} parent=1 // pred_check_branch
      %52 = sbr.rel (0) target = $region29
    $region28: #{tpu_custom_call.1} parent=1 // pred_region
      _
    $region29: #{tpu_custom_call.1} parent=1 // pred_fallthru
      _
    // Predicated region
    $region30: #{tpu_custom_call.1} parent=1 // pred_check
      _
    $region31: #{tpu_custom_call.1} parent=1 // pred_check_branch
      %54 = sbr.rel (0) target = $region33
    $region32: #{tpu_custom_call.1} parent=1 // pred_region
      _
    $region33: #{tpu_custom_call.1} parent=1 // pred_fallthru
      _
    // Predicated region
    $region34: #{tpu_custom_call.1} parent=1 // pred_check
      _
    $region35: #{tpu_custom_call.1} parent=1 // pred_check_branch
      %56 = sbr.rel (0) target = $region37
    $region36: #{tpu_custom_call.1} parent=1 // pred_region
      _
    $region37: #{tpu_custom_call.1} parent=1 // pred_fallthru
      _
    // Predicated region
    $region38: #{tpu_custom_call.1} parent=1 // pred_check
      _
    $region39: #{tpu_custom_call.1} parent=1 // pred_check_branch
      %58 = sbr.rel (0) target = $region41
    $region40: #{tpu_custom_call.1} parent=1 // pred_region
      %60 = dma.done [#allocation3], 1024
    $region41: #{tpu_custom_call.1} parent=1 // pred_fallthru
      _
    // Predicated region
    $region42: #{tpu_custom_call.1} parent=1 // pred_check
      _
    $region43: #{tpu_custom_call.1} parent=1 // pred_check_branch
      %62 = sbr.rel (0) target = $region45
    $region44: #{tpu_custom_call.1} parent=1 // pred_region
      %64 = dma.done [#allocation6], 1024
    $region45: #{tpu_custom_call.1} parent=1 // pred_fallthru
      _
    %v66 = vld [vmem:[%s0] sm:$0xff]
    %v67 = vld [vmem:[%s0 + $0x8] sm:$0xff]
    %v68 = vld [vmem:[%s0 + $0x10] sm:$0xff]
    %v69 = vpack.c.bf16 %v67, %v66
    %v70 = vpack.c.bf16 %v68, %v68
    %v71 = vld [vmem:[%s1] sm:$0xf]
    %v72 = vld [vmem:[%s1 + $0x4] sm:$0xf]
    %v73 = vld [vmem:[%s2] sm:$0x1]
    %v75 = vperm.slane %v73, 0
    %v79 = vunpack.c.l.b16 %v71
    %v80 = vunpack.c.l.b16 %v72
    %v81 = vpack.c.b16 %v80, %v79
    %vm83 = vcmask 130048
    %v85 = vsel %vm83, %v69, 0
    %v88 = vsel %vm83, %v70, 0
    %90 = vmatpush.bf16.msra.mxu0 0
    %91 = vmatpush.bf16.msra.mxu0 0
    %92 = vmatpush.bf16.msra.mxu0 0
    %93 = vmatpush.bf16.msra.mxu0 0
    %94 = vmatpush.bf16.msra.mxu0 0
    %95 = vmatpush.bf16.msra.mxu0 0
    %96 = vmatpush.bf16.msra.mxu0 0
    %97 = vmatpush.bf16.msra.mxu0 %v81
    %98 = vmatmul.bf16.gmra.mxu0 %v85
    %v99 = vpop.f32.mrf.mxu0
    %v100 = vadd.f32 %v75, %v99
    %v101 = vpop.f32.mrf.mxu0
    %v102 = vadd.f32 %v75, %v101
    %103 = vmatmul.bf16.gmra.mxu0 %v88
    %v104 = vpop.f32.mrf.mxu0
    %v105 = vadd.f32 %v75, %v104
    %v106 = vpop.f32.mrf.mxu0
    %107 = vdwg.mxu0
    %v108 = vmax.f32 %v100, 0.0
    %v109 = vmax.f32 %v102, 0.0
    %v110 = vmax.f32 %v105, 0.0
    %v111 = vpack.c.bf16 %v109, %v108
    %v112 = vpack.c.bf16 %v110, %v110
    %v113 = vld [vmem:[#allocation2] sm:$0xf]
    %v114 = vld [vmem:[#allocation2 + $0x4] sm:$0xf]
    %v115 = vld [vmem:[#allocation2 + $0x8] sm:$0xf]
    %v116 = vld [vmem:[#allocation2 + $0xc] sm:$0xf]
    %v117 = vld [vmem:[#allocation2 + $0x10] sm:$0xf]
    %v118 = vld [vmem:[#allocation2 + $0x14] sm:$0xf]
    %v119 = vld [vmem:[#allocation2 + $0x18] sm:$0xf]
    %v120 = vld [vmem:[#allocation2 + $0x1c] sm:$0xf]
    %v121 = vld [vmem:[#allocation2 + $0x20] sm:$0xf]
    %v122 = vld [vmem:[#allocation2 + $0x24] sm:$0xf]
    %v123 = vld [vmem:[#allocation2 + $0x28] sm:$0xf]
    %v124 = vld [vmem:[#allocation2 + $0x2c] sm:$0xf]
    %v125 = vld [vmem:[#allocation2 + $0x30] sm:$0xf]
    %v126 = vld [vmem:[#allocation2 + $0x34] sm:$0xf]
    %v127 = vld [vmem:[#allocation2 + $0x38] sm:$0xf]
    %v128 = vld [vmem:[#allocation2 + $0x3c] sm:$0xf]
    %v129 = vld [vmem:[%s4] sm:$0x1]
    %v131 = vperm.slane %v129, 0
    %v149 = vunpack.c.l.b16 %v113
    %v150 = vunpack.c.l.b16 %v114
    %v151 = vunpack.c.l.b16 %v115
    %v152 = vunpack.c.l.b16 %v116
    %v153 = vunpack.c.l.b16 %v117
    %v154 = vunpack.c.l.b16 %v118
    %v155 = vunpack.c.l.b16 %v119
    %v156 = vunpack.c.l.b16 %v120
    %v157 = vunpack.c.l.b16 %v121
    %v158 = vunpack.c.l.b16 %v122
    %v159 = vunpack.c.l.b16 %v123
    %v160 = vunpack.c.l.b16 %v124
    %v161 = vunpack.c.l.b16 %v125
    %v162 = vunpack.c.l.b16 %v126
    %v163 = vunpack.c.l.b16 %v127
    %v164 = vunpack.c.l.b16 %v128
    %v165 = vpack.c.b16 %v150, %v149
    %v166 = vpack.c.b16 %v152, %v151
    %v167 = vpack.c.b16 %v154, %v153
    %v168 = vpack.c.b16 %v156, %v155
    %v169 = vpack.c.b16 %v158, %v157
    %v170 = vpack.c.b16 %v160, %v159
    %v171 = vpack.c.b16 %v162, %v161
    %v172 = vpack.c.b16 %v164, %v163
    %181 = vmatpush.bf16.msra.mxu0 %v172
    %182 = vmatpush.bf16.msra.mxu0 %v171
    %183 = vmatpush.bf16.msra.mxu0 %v170
    %184 = vmatpush.bf16.msra.mxu0 %v169
    %185 = vmatpush.bf16.msra.mxu0 %v168
    %186 = vmatpush.bf16.msra.mxu0 %v167
    %187 = vmatpush.bf16.msra.mxu0 %v166
    %188 = vmatpush.bf16.msra.mxu0 %v165
    %189 = vmatmul.bf16.gmra.mxu0 %v111
    %v190 = vpop.f32.mrf.mxu0
    %v191 = vadd.f32 %v131, %v190
    %v192 = vpop.f32.mrf.mxu0
    %v193 = vadd.f32 %v131, %v192
    %194 = vmatmul.bf16.gmra.mxu0 %v112
    %v195 = vpop.f32.mrf.mxu0
    %v196 = vadd.f32 %v131, %v195
    %v197 = vpop.f32.mrf.mxu0
    %198 = vdwg.mxu0
    %v199 = vmax.f32 %v191, 0.0
    %v200 = vmax.f32 %v193, 0.0
    %v201 = vmax.f32 %v196, 0.0
    %v202 = vpack.c.bf16 %v200, %v199
    %v203 = vpack.c.bf16 %v201, %v201
    %v204 = vld [vmem:[#allocation5] sm:$0xf]
    %v205 = vld [vmem:[#allocation5 + $0x4] sm:$0xf]
    %v206 = vld [vmem:[#allocation5 + $0x8] sm:$0xf]
    %v207 = vld [vmem:[#allocation5 + $0xc] sm:$0xf]
    %v208 = vld [vmem:[#allocation5 + $0x10] sm:$0xf]
    %v209 = vld [vmem:[#allocation5 + $0x14] sm:$0xf]
    %v210 = vld [vmem:[#allocation5 + $0x18] sm:$0xf]
    %v211 = vld [vmem:[#allocation5 + $0x1c] sm:$0xf]
    %v212 = vld [vmem:[#allocation5 + $0x20] sm:$0xf]
    %v213 = vld [vmem:[#allocation5 + $0x24] sm:$0xf]
    %v214 = vld [vmem:[#allocation5 + $0x28] sm:$0xf]
    %v215 = vld [vmem:[#allocation5 + $0x2c] sm:$0xf]
    %v216 = vld [vmem:[#allocation5 + $0x30] sm:$0xf]
    %v217 = vld [vmem:[#allocation5 + $0x34] sm:$0xf]
    %v218 = vld [vmem:[#allocation5 + $0x38] sm:$0xf]
    %v219 = vld [vmem:[#allocation5 + $0x3c] sm:$0xf]
    %v220 = vld [vmem:[%s6] sm:$0x1]
    %v222 = vperm.slane %v220, 0
    %v240 = vunpack.c.l.b16 %v204
    %v241 = vunpack.c.l.b16 %v205
    %v242 = vunpack.c.l.b16 %v206
    %v243 = vunpack.c.l.b16 %v207
    %v244 = vunpack.c.l.b16 %v208
    %v245 = vunpack.c.l.b16 %v209
    %v246 = vunpack.c.l.b16 %v210
    %v247 = vunpack.c.l.b16 %v211
    %v248 = vunpack.c.l.b16 %v212
    %v249 = vunpack.c.l.b16 %v213
    %v250 = vunpack.c.l.b16 %v214
    %v251 = vunpack.c.l.b16 %v215
    %v252 = vunpack.c.l.b16 %v216
    %v253 = vunpack.c.l.b16 %v217
    %v254 = vunpack.c.l.b16 %v218
    %v255 = vunpack.c.l.b16 %v219
    %v256 = vpack.c.b16 %v241, %v240
    %v257 = vpack.c.b16 %v243, %v242
    %v258 = vpack.c.b16 %v245, %v244
    %v259 = vpack.c.b16 %v247, %v246
    %v260 = vpack.c.b16 %v249, %v248
    %v261 = vpack.c.b16 %v251, %v250
    %v262 = vpack.c.b16 %v253, %v252
    %v263 = vpack.c.b16 %v255, %v254
    %272 = vmatpush.bf16.msra.mxu0 %v263
    %273 = vmatpush.bf16.msra.mxu0 %v262
    %274 = vmatpush.bf16.msra.mxu0 %v261
    %275 = vmatpush.bf16.msra.mxu0 %v260
    %276 = vmatpush.bf16.msra.mxu0 %v259
    %277 = vmatpush.bf16.msra.mxu0 %v258
    %278 = vmatpush.bf16.msra.mxu0 %v257
    %279 = vmatpush.bf16.msra.mxu0 %v256
    %280 = vmatmul.bf16.gmra.mxu0 %v202
    %v281 = vpop.f32.mrf.mxu0
    %v282 = vadd.f32 %v222, %v281
    %v283 = vpop.f32.mrf.mxu0
    %v284 = vadd.f32 %v222, %v283
    %285 = vmatmul.bf16.gmra.mxu0 %v203
    %v286 = vpop.f32.mrf.mxu0
    %v287 = vadd.f32 %v222, %v286
    %v288 = vpop.f32.mrf.mxu0
    %289 = vdwg.mxu0
    %v290 = vmax.f32 %v282, 0.0
    %v291 = vmax.f32 %v284, 0.0
    %v292 = vmax.f32 %v287, 0.0
    %v293 = vld [vmem:[%s7] sm:$0xf]
    %v294 = vpack.c.bf16 %v291, %v290
    %v295 = vpack.c.bf16 %v292, %v292
    %v296 = vld [vmem:[%s8] sm:$0xff]
    %298 = vset.pattern.permute.xlu0 0
    %299 = vperm.xlu0 %298, %v296
    %v300 = vpop.permute.xlu0 %299
    %302 = vmatpush.bf16.xpose.msra.mxu0 0
    %303 = vmatpush.bf16.xpose.msra.mxu0 0
    %304 = vmatpush.bf16.xpose.msra.mxu0 0
    %305 = vmatpush.bf16.xpose.msra.mxu0 0
    %306 = vmatpush.bf16.xpose.msra.mxu0 0
    %307 = vmatpush.bf16.xpose.msra.mxu0 0
    %308 = vmatpush.bf16.xpose.msra.mxu0 %v295
    %309 = vmatpush.bf16.xpose.msra.mxu0 %v294
    %310 = vmatmul.bf16.gmra.mxu0 %v293
    %v311 = vpop.f32.mrf.mxu0
    %v312 = vadd.f32 %v300, %v311
    %v313 = vpop.f32.mrf.mxu0
    %314 = vdwg.mxu0
    %v315 = vmax.f32 %v312, 0.0
    %v316 = vtanh.pop %v315
    %vm317 = vcmask 195584
    %318 = vst.msk [vmem:[#allocation7] sm:$0xff] %vm317, %v316
    // Predicated region
    $region46: #{tpu_custom_call.1} parent=1 // pred_check
      _
    $region47: #{tpu_custom_call.1} parent=1 // pred_check_branch
      %320 = sbr.rel (0) target = $region49
    $region48: #{tpu_custom_call.1} parent=1 // pred_region
      %322 = vsyncadd [#allocation4], 0
      %s324 = sshll.u32 [#allocation7], 4
      %s325 = int_to_ptr.vmem [resolvable:$true] %s324
      %s326 = sshll.u32 %s9, 4
      %s327 = int_to_ptr.hbm [resolvable:$true] %s326
      %329 = dma.vmem_to_hbm [thread:$0]  %s325, 128, %s327, [#allocation4]
    $region49: #{tpu_custom_call.1} parent=1 // pred_fallthru
      _
    // Predicated region
    $region50: #{tpu_custom_call.1} parent=1 // pred_check
      _
    $region51: #{tpu_custom_call.1} parent=1 // pred_check_branch
      %331 = sbr.rel (0) target = $region53
    $region52: #{tpu_custom_call.1} parent=1 // pred_region
      %333 = dma.done [#allocation4], 128
    $region53: #{tpu_custom_call.1} parent=1 // pred_fallthru
      _
    %334 = vsyncpa [#allocation3], 1
    %335 = vsyncpa [#allocation6], 1
    %336 = vsyncpa [#allocation4], 1

</llo_original>
